<compile_context>
chip_gen: v5e
topology: v5e:2x2
jax: 0.10.0
libtpu: 0.0.40
codegen_flags: <defaults>
</compile_context>

<pallas_src>
import functools

import jax
import jax.numpy as jnp
from jax.experimental import pallas as pl
from jax.experimental.pallas import tpu as pltpu

NUM_MIX = 3
NUM_DIMS = 14
OUT_DIM = NUM_DIMS * NUM_MIX      # 42 logical output features per head
PAD = 128                         # lane-dense padded feature width
BN_EPS = 1e-5


def _round_up(x, m):
    return ((x + m - 1) // m) * m


# --------------------------------------------------------------------------
# Kernel
# --------------------------------------------------------------------------
def _gmm_kernel(s_ref, a_ref,
                w1s_ref, w1a_ref, b1_ref,
                w2_ref, b2_ref,
                wmh_ref, bmh_ref, wmo_ref, bmo_ref,
                wsh_ref, bsh_ref, wso_ref, bso_ref,
                wph_ref, bph_ref, wpo_ref, bpo_ref,
                u_ref, std_ref, phi_ref,
                *, out_dim):
    f32 = jnp.float32

    # ---- shared trunk: split first matmul (no lane concat), BN pre-folded ----
    h = jnp.dot(s_ref[...], w1s_ref[...], preferred_element_type=f32)
    h = h + jnp.dot(a_ref[...], w1a_ref[...], preferred_element_type=f32)
    h = jnp.maximum(h + b1_ref[...], 0.0)
    h = jnp.maximum(
        jnp.dot(h, w2_ref[...], preferred_element_type=f32) + b2_ref[...], 0.0)

    # ---- mean head ----
    hm = jnp.maximum(
        jnp.dot(h, wmh_ref[...], preferred_element_type=f32) + bmh_ref[...], 0.0)
    u_ref[...] = jnp.dot(hm, wmo_ref[...], preferred_element_type=f32) + bmo_ref[...]

    # ---- std head: Softplus then clamp(min=0.001) ----
    hs = jnp.maximum(
        jnp.dot(h, wsh_ref[...], preferred_element_type=f32) + bsh_ref[...], 0.0)
    z = jnp.dot(hs, wso_ref[...], preferred_element_type=f32) + bso_ref[...]
    softplus = jnp.maximum(z, 0.0) + jnp.log(1.0 + jnp.exp(-jnp.abs(z)))
    std_ref[...] = jnp.maximum(softplus, 0.001)

    # ---- phi head: Softmax over the 42 real logits (pad lanes masked out) ----
    hp = jnp.maximum(
        jnp.dot(h, wph_ref[...], preferred_element_type=f32) + bph_ref[...], 0.0)
    logits = jnp.dot(hp, wpo_ref[...], preferred_element_type=f32) + bpo_ref[...]
    lane = jax.lax.broadcasted_iota(jnp.int32, logits.shape, 1)
    logits = jnp.where(lane < out_dim, logits, -1e30)
    m = jnp.max(logits, axis=-1, keepdims=True)
    e = jnp.exp(logits - m)
    phi_ref[...] = e / jnp.sum(e, axis=-1, keepdims=True)


# --------------------------------------------------------------------------
# Wrapper
# --------------------------------------------------------------------------
def gmm_forward(state, action, kp):
    """state: [B, S], action: [B, A] -> (u, std, phi) each [B, 14, 3]."""
    B, S = state.shape
    A = action.shape[1]

    TB = min(512, _round_up(B, 8))          # batch tile (rows), multiple of 8
    B_pad = _round_up(B, TB)
    if B_pad != B:
        state = jnp.pad(state, ((0, B_pad - B), (0, 0)))
        action = jnp.pad(action, ((0, B_pad - B), (0, 0)))
    grid = (B_pad // TB,)

    def row_spec(feat):
        return pl.BlockSpec((TB, feat), lambda i: (i, 0))

    def resident_spec(arr):                 # constant block -> stays in VMEM
        return pl.BlockSpec(arr.shape, lambda i: (0, 0))

    weights = (kp["w1s"], kp["w1a"], kp["b1"], kp["w2"], kp["b2"],
               kp["wmh"], kp["bmh"], kp["wmo"], kp["bmo"],
               kp["wsh"], kp["bsh"], kp["wso"], kp["bso"],
               kp["wph"], kp["bph"], kp["wpo"], kp["bpo"])

    in_specs = [row_spec(S), row_spec(A)] + [resident_spec(w) for w in weights]
    out_spec = pl.BlockSpec((TB, PAD), lambda i: (i, 0))
    out_shape = jax.ShapeDtypeStruct((B_pad, PAD), jnp.float32)

    flops = 2 * B_pad * (S * PAD + A * PAD + PAD * PAD + 3 * 2 * PAD * PAD)
    bytes_accessed = (sum(int(w.size) for w in weights)
                      + B_pad * (S + A + 3 * PAD)) * 4
    cost = pl.CostEstimate(flops=flops,
                           transcendentals=2 * B_pad * PAD,
                           bytes_accessed=bytes_accessed)

    u, std, phi = pl.pallas_call(
        functools.partial(_gmm_kernel, out_dim=OUT_DIM),
        out_shape=(out_shape, out_shape, out_shape),
        grid_spec=pltpu.PrefetchScalarGridSpec(
            num_scalar_prefetch=0,
            grid=grid,
            in_specs=in_specs,
            out_specs=[out_spec, out_spec, out_spec],
        ),
        compiler_params=pltpu.CompilerParams(
            dimension_semantics=("parallel",)),
        cost_estimate=cost,
    )(state, action, *weights)

    u = u[:B, :OUT_DIM].reshape(B, NUM_DIMS, NUM_MIX)
    std = std[:B, :OUT_DIM].reshape(B, NUM_DIMS, NUM_MIX)
    phi = phi[:B, :OUT_DIM].reshape(B, NUM_DIMS, NUM_MIX)
    return u, std, phi


# --------------------------------------------------------------------------
# Parameter init (PyTorch-style), BN folding and lane padding
# --------------------------------------------------------------------------
def init_raw_params(key, input_size, hidden_size):
    """xavier_normal weights, ones biases (as in the module), BN eval stats."""
    h0, h1, h2 = hidden_size

    def xavier(k, fan_in, fan_out):
        std = (2.0 / (fan_in + fan_out)) ** 0.5
        return std * jax.random.normal(k, (fan_in, fan_out), jnp.float32)

    def bn(k, n):
        k1, k2, k3, k4 = jax.random.split(k, 4)
        gamma = jax.random.uniform(k1, (n,), jnp.float32, 0.5, 1.5)
        beta = 0.1 * jax.random.normal(k2, (n,), jnp.float32)
        mean = 0.1 * jax.random.normal(k3, (n,), jnp.float32)
        var = jax.random.uniform(k4, (n,), jnp.float32, 0.5, 1.5)
        return (gamma, beta, mean, var)

    ks = jax.random.split(key, 13)
    raw = {
        "bn0": bn(ks[0], input_size),
        "w1": xavier(ks[1], input_size, h0), "b1": jnp.ones((h0,), jnp.float32),
        "bn1": bn(ks[2], h0),
        "w2": xavier(ks[3], h0, h1), "b2": jnp.ones((h1,), jnp.float32),
        "bn_m": bn(ks[4], h1),
        "w_m_h": xavier(ks[5], h1, h2), "b_m_h": jnp.ones((h2,), jnp.float32),
        "w_m_o": xavier(ks[6], h2, OUT_DIM), "b_m_o": jnp.ones((OUT_DIM,), jnp.float32),
        "bn_s": bn(ks[7], h1),
        "w_s_h": xavier(ks[8], h1, h2), "b_s_h": jnp.ones((h2,), jnp.float32),
        "w_s_o": xavier(ks[9], h2, OUT_DIM), "b_s_o": jnp.ones((OUT_DIM,), jnp.float32),
        "bn_p": bn(ks[10], h1),
        "w_p_h": xavier(ks[11], h1, h2), "b_p_h": jnp.ones((h2,), jnp.float32),
        "w_p_o": xavier(ks[12], h2, OUT_DIM), "b_p_o": jnp.ones((OUT_DIM,), jnp.float32),
    }
    return raw


def _fold_bn_linear(bn_params, w, b):
    gamma, beta, mean, var = bn_params
    scale = gamma / jnp.sqrt(var + BN_EPS)
    shift = beta - mean * scale
    return scale[:, None] * w, shift @ w + b


def _pad2(x, rows, cols):
    return jnp.pad(x, ((0, rows - x.shape[0]), (0, cols - x.shape[1])))


def fold_and_pad_params(raw, state_dim, action_dim):
    """Fold eval-mode BN into the following Linear; zero-pad to 128 lanes."""
    w1_f, b1_f = _fold_bn_linear(raw["bn0"], raw["w1"], raw["b1"])
    w2_f, b2_f = _fold_bn_linear(raw["bn1"], raw["w2"], raw["b2"])

    kp = {
        "w1s": _pad2(w1_f[:state_dim], state_dim, PAD),
        "w1a": _pad2(w1_f[state_dim:], action_dim, PAD),
        "b1": _pad2(b1_f[None, :], 1, PAD),
        "w2": _pad2(w2_f, PAD, PAD),
        "b2": _pad2(b2_f[None, :], 1, PAD),
    }
    for tag in ("m", "s", "p"):
        wh_f, bh_f = _fold_bn_linear(raw[f"bn_{tag}"],
                                     raw[f"w_{tag}_h"], raw[f"b_{tag}_h"])
        kp[f"w{tag}h"] = _pad2(wh_f, PAD, PAD)
        kp[f"b{tag}h"] = _pad2(bh_f[None, :], 1, PAD)
        kp[f"w{tag}o"] = _pad2(raw[f"w_{tag}_o"], PAD, PAD)
        kp[f"b{tag}o"] = _pad2(raw[f"b_{tag}_o"][None, :], 1, PAD)
    return kp


# --------------------------------------------------------------------------
# Pure-JAX reference (eval-mode BatchNorm, unfolded params)
# --------------------------------------------------------------------------
def reference_forward(state, action, raw):
    def bn(x, p):
        gamma, beta, mean, var = p
        return (x - mean) / jnp.sqrt(var + BN_EPS) * gamma + beta

    x = jnp.concatenate([state, action], axis=1)
    x = jnp.maximum(bn(x, raw["bn0"]) @ raw["w1"] + raw["b1"], 0.0)
    x = jnp.maximum(bn(x, raw["bn1"]) @ raw["w2"] + raw["b2"], 0.0)

    def head(tag):
        h = jnp.maximum(bn(x, raw[f"bn_{tag}"]) @ raw[f"w_{tag}_h"]
                        + raw[f"b_{tag}_h"], 0.0)
        return h @ raw[f"w_{tag}_o"] + raw[f"b_{tag}_o"]

    u = head("m")
    std = jnp.maximum(jax.nn.softplus(head("s")), 0.001)
    phi = jax.nn.softmax(head("p"), axis=1)          # torch Softmax() -> dim=1
    B = state.shape[0]
    return (u.reshape(B, NUM_DIMS, NUM_MIX),
            std.reshape(B, NUM_DIMS, NUM_MIX),
            phi.reshape(B, NUM_DIMS, NUM_MIX))


# --------------------------------------------------------------------------
if __name__ == "__main__":
    batch = 4
    state_dim = 10
    action_dim = 4
    hidden_size = (32, 64, 32)
    input_size = state_dim + action_dim

    key = jax.random.PRNGKey(0)
    key, ks, ka, kw = jax.random.split(key, 4)
    state = jax.random.normal(ks, (batch, state_dim), jnp.float32)
    action = jax.random.normal(ka, (batch, action_dim), jnp.float32)

    raw = init_raw_params(kw, input_size, hidden_size)
    kparams = fold_and_pad_params(raw, state_dim, action_dim)

    u, std, phi = gmm_forward(state, action, kparams)
    jax.block_until_ready((u, std, phi))

    u_r, std_r, phi_r = reference_forward(state, action, raw)
    assert u.shape == (batch, NUM_DIMS, NUM_MIX), u.shape
    assert jnp.allclose(u, u_r, atol=1e-4, rtol=1e-4)
    assert jnp.allclose(std, std_r, atol=1e-4, rtol=1e-4)
    assert jnp.allclose(phi, phi_r, atol=1e-4, rtol=1e-4)
    assert jnp.allclose(phi.sum(axis=(1, 2)), 1.0, atol=1e-5)
    assert bool(jnp.all(std >= 0.001))

    # TODO(synk): constructing the torch.distributions MixtureSameFamily object
    # has no Pallas equivalent; the kernel returns its parameters (u, std, phi).
    print("KERNEL_OK")
</pallas_src>

<mosaic_0001>
module attributes {stable_mosaic.version = 11 : i64} {
  func.func @_gmm_kernel(%arg0: i32, %arg1: memref<8x10xf32, #tpu.memory_space<vmem>>, %arg2: memref<8x4xf32, #tpu.memory_space<vmem>>, %arg3: memref<10x128xf32, #tpu.memory_space<vmem>>, %arg4: memref<4x128xf32, #tpu.memory_space<vmem>>, %arg5: memref<1x128xf32, #tpu.memory_space<vmem>>, %arg6: memref<128x128xf32, #tpu.memory_space<vmem>>, %arg7: memref<1x128xf32, #tpu.memory_space<vmem>>, %arg8: memref<128x128xf32, #tpu.memory_space<vmem>>, %arg9: memref<1x128xf32, #tpu.memory_space<vmem>>, %arg10: memref<128x128xf32, #tpu.memory_space<vmem>>, %arg11: memref<1x128xf32, #tpu.memory_space<vmem>>, %arg12: memref<128x128xf32, #tpu.memory_space<vmem>>, %arg13: memref<1x128xf32, #tpu.memory_space<vmem>>, %arg14: memref<128x128xf32, #tpu.memory_space<vmem>>, %arg15: memref<1x128xf32, #tpu.memory_space<vmem>>, %arg16: memref<128x128xf32, #tpu.memory_space<vmem>>, %arg17: memref<1x128xf32, #tpu.memory_space<vmem>>, %arg18: memref<128x128xf32, #tpu.memory_space<vmem>>, %arg19: memref<1x128xf32, #tpu.memory_space<vmem>>, %arg20: memref<8x128xf32, #tpu.memory_space<vmem>>, %arg21: memref<8x128xf32, #tpu.memory_space<vmem>>, %arg22: memref<8x128xf32, #tpu.memory_space<vmem>>) attributes {dimension_semantics = [#tpu.dimension_semantics<parallel>], iteration_bounds = array<i64: 1>, scalar_prefetch = 0 : i64, scratch_operands = 0 : i64, tpu.core_type = #tpu.core_type<tc>, window_params = [{transform_indices = @transform_0, window_bounds = array<i64: 8, 10>}, {transform_indices = @transform_1, window_bounds = array<i64: 8, 4>}, {pipeline_mode = #tpu.pipeline_mode<synchronous>, transform_indices = @transform_2, window_bounds = array<i64: 10, 128>}, {pipeline_mode = #tpu.pipeline_mode<synchronous>, transform_indices = @transform_3, window_bounds = array<i64: 4, 128>}, {pipeline_mode = #tpu.pipeline_mode<synchronous>, transform_indices = @transform_4, window_bounds = array<i64: 1, 128>}, {pipeline_mode = #tpu.pipeline_mode<synchronous>, transform_indices = @transform_5, window_bounds = array<i64: 128, 128>}, {pipeline_mode = #tpu.pipeline_mode<synchronous>, transform_indices = @transform_6, window_bounds = array<i64: 1, 128>}, {pipeline_mode = #tpu.pipeline_mode<synchronous>, transform_indices = @transform_7, window_bounds = array<i64: 128, 128>}, {pipeline_mode = #tpu.pipeline_mode<synchronous>, transform_indices = @transform_8, window_bounds = array<i64: 1, 128>}, {pipeline_mode = #tpu.pipeline_mode<synchronous>, transform_indices = @transform_9, window_bounds = array<i64: 128, 128>}, {pipeline_mode = #tpu.pipeline_mode<synchronous>, transform_indices = @transform_10, window_bounds = array<i64: 1, 128>}, {pipeline_mode = #tpu.pipeline_mode<synchronous>, transform_indices = @transform_11, window_bounds = array<i64: 128, 128>}, {pipeline_mode = #tpu.pipeline_mode<synchronous>, transform_indices = @transform_12, window_bounds = array<i64: 1, 128>}, {pipeline_mode = #tpu.pipeline_mode<synchronous>, transform_indices = @transform_13, window_bounds = array<i64: 128, 128>}, {pipeline_mode = #tpu.pipeline_mode<synchronous>, transform_indices = @transform_14, window_bounds = array<i64: 1, 128>}, {pipeline_mode = #tpu.pipeline_mode<synchronous>, transform_indices = @transform_15, window_bounds = array<i64: 128, 128>}, {pipeline_mode = #tpu.pipeline_mode<synchronous>, transform_indices = @transform_16, window_bounds = array<i64: 1, 128>}, {pipeline_mode = #tpu.pipeline_mode<synchronous>, transform_indices = @transform_17, window_bounds = array<i64: 128, 128>}, {pipeline_mode = #tpu.pipeline_mode<synchronous>, transform_indices = @transform_18, window_bounds = array<i64: 1, 128>}, {transform_indices = @transform_19, window_bounds = array<i64: 8, 128>}, {transform_indices = @transform_20, window_bounds = array<i64: 8, 128>}, {transform_indices = @transform_21, window_bounds = array<i64: 8, 128>}]} {
    %c0 = arith.constant 0 : index
    %c0_0 = arith.constant 0 : index
    %0 = vector.load %arg1[%c0, %c0_0] : memref<8x10xf32, #tpu.memory_space<vmem>>, vector<8x10xf32>
    %c0_1 = arith.constant 0 : index
    %c0_2 = arith.constant 0 : index
    %1 = vector.load %arg3[%c0_1, %c0_2] : memref<10x128xf32, #tpu.memory_space<vmem>>, vector<10x128xf32>
    %cst = arith.constant dense<0.000000e+00> : vector<8x128xf32>
    %2 = tpu.matmul %0, %1, %cst {dimension_numbers = #tpu.dot_dimension_numbers<[1], [0], [0], [1], [0, 0, 1, 1], [], []>} : vector<8x10xf32>, vector<10x128xf32>, vector<8x128xf32> -> vector<8x128xf32>
    %c0_3 = arith.constant 0 : index
    %c0_4 = arith.constant 0 : index
    %3 = vector.load %arg2[%c0_3, %c0_4] : memref<8x4xf32, #tpu.memory_space<vmem>>, vector<8x4xf32>
    %c0_5 = arith.constant 0 : index
    %c0_6 = arith.constant 0 : index
    %4 = vector.load %arg4[%c0_5, %c0_6] : memref<4x128xf32, #tpu.memory_space<vmem>>, vector<4x128xf32>
    %cst_7 = arith.constant dense<0.000000e+00> : vector<8x128xf32>
    %5 = tpu.matmul %3, %4, %cst_7 {dimension_numbers = #tpu.dot_dimension_numbers<[1], [0], [0], [1], [0, 0, 1, 1], [], []>} : vector<8x4xf32>, vector<4x128xf32>, vector<8x128xf32> -> vector<8x128xf32>
    %6 = arith.addf %2, %5 : vector<8x128xf32>
    %c0_8 = arith.constant 0 : index
    %c0_9 = arith.constant 0 : index
    %7 = vector.load %arg5[%c0_8, %c0_9] : memref<1x128xf32, #tpu.memory_space<vmem>>, vector<1x128xf32>
    %8 = vector.broadcast %7 : vector<1x128xf32> to vector<8x128xf32>
    %9 = arith.addf %6, %8 : vector<8x128xf32>
    %cst_10 = arith.constant 0.000000e+00 : f32
    %10 = vector.broadcast %cst_10 : f32 to vector<8x128xf32>
    %11 = arith.maximumf %9, %10 : vector<8x128xf32>
    %c0_11 = arith.constant 0 : index
    %c0_12 = arith.constant 0 : index
    %12 = vector.load %arg6[%c0_11, %c0_12] : memref<128x128xf32, #tpu.memory_space<vmem>>, vector<128x128xf32>
    %cst_13 = arith.constant dense<0.000000e+00> : vector<8x128xf32>
    %13 = tpu.matmul %11, %12, %cst_13 {dimension_numbers = #tpu.dot_dimension_numbers<[1], [0], [0], [1], [0, 0, 1, 1], [], []>} : vector<8x128xf32>, vector<128x128xf32>, vector<8x128xf32> -> vector<8x128xf32>
    %c0_14 = arith.constant 0 : index
    %c0_15 = arith.constant 0 : index
    %14 = vector.load %arg7[%c0_14, %c0_15] : memref<1x128xf32, #tpu.memory_space<vmem>>, vector<1x128xf32>
    %15 = vector.broadcast %14 : vector<1x128xf32> to vector<8x128xf32>
    %16 = arith.addf %13, %15 : vector<8x128xf32>
    %cst_16 = arith.constant 0.000000e+00 : f32
    %17 = vector.broadcast %cst_16 : f32 to vector<8x128xf32>
    %18 = arith.maximumf %16, %17 : vector<8x128xf32>
    %c0_17 = arith.constant 0 : index
    %c0_18 = arith.constant 0 : index
    %19 = vector.load %arg8[%c0_17, %c0_18] : memref<128x128xf32, #tpu.memory_space<vmem>>, vector<128x128xf32>
    %cst_19 = arith.constant dense<0.000000e+00> : vector<8x128xf32>
    %20 = tpu.matmul %18, %19, %cst_19 {dimension_numbers = #tpu.dot_dimension_numbers<[1], [0], [0], [1], [0, 0, 1, 1], [], []>} : vector<8x128xf32>, vector<128x128xf32>, vector<8x128xf32> -> vector<8x128xf32>
    %c0_20 = arith.constant 0 : index
    %c0_21 = arith.constant 0 : index
    %21 = vector.load %arg9[%c0_20, %c0_21] : memref<1x128xf32, #tpu.memory_space<vmem>>, vector<1x128xf32>
    %22 = vector.broadcast %21 : vector<1x128xf32> to vector<8x128xf32>
    %23 = arith.addf %20, %22 : vector<8x128xf32>
    %cst_22 = arith.constant 0.000000e+00 : f32
    %24 = vector.broadcast %cst_22 : f32 to vector<8x128xf32>
    %25 = arith.maximumf %23, %24 : vector<8x128xf32>
    %c0_23 = arith.constant 0 : index
    %c0_24 = arith.constant 0 : index
    %26 = vector.load %arg10[%c0_23, %c0_24] : memref<128x128xf32, #tpu.memory_space<vmem>>, vector<128x128xf32>
    %cst_25 = arith.constant dense<0.000000e+00> : vector<8x128xf32>
    %27 = tpu.matmul %25, %26, %cst_25 {dimension_numbers = #tpu.dot_dimension_numbers<[1], [0], [0], [1], [0, 0, 1, 1], [], []>} : vector<8x128xf32>, vector<128x128xf32>, vector<8x128xf32> -> vector<8x128xf32>
    %c0_26 = arith.constant 0 : index
    %c0_27 = arith.constant 0 : index
    %28 = vector.load %arg11[%c0_26, %c0_27] : memref<1x128xf32, #tpu.memory_space<vmem>>, vector<1x128xf32>
    %29 = vector.broadcast %28 : vector<1x128xf32> to vector<8x128xf32>
    %30 = arith.addf %27, %29 : vector<8x128xf32>
    %c0_28 = arith.constant 0 : index
    %c0_29 = arith.constant 0 : index
    %31 = vector.load %arg20[%c0_28, %c0_29] : memref<8x128xf32, #tpu.memory_space<vmem>>, vector<8x128xf32>
    tpu.vector_store %arg20[%c0_28, %c0_29], %30 {strides = array<i32>} : memref<8x128xf32, #tpu.memory_space<vmem>>, vector<8x128xf32>,
    %c0_30 = arith.constant 0 : index
    %c0_31 = arith.constant 0 : index
    %32 = vector.load %arg12[%c0_30, %c0_31] : memref<128x128xf32, #tpu.memory_space<vmem>>, vector<128x128xf32>
    %cst_32 = arith.constant dense<0.000000e+00> : vector<8x128xf32>
    %33 = tpu.matmul %18, %32, %cst_32 {dimension_numbers = #tpu.dot_dimension_numbers<[1], [0], [0], [1], [0, 0, 1, 1], [], []>} : vector<8x128xf32>, vector<128x128xf32>, vector<8x128xf32> -> vector<8x128xf32>
    %c0_33 = arith.constant 0 : index
    %c0_34 = arith.constant 0 : index
    %34 = vector.load %arg13[%c0_33, %c0_34] : memref<1x128xf32, #tpu.memory_space<vmem>>, vector<1x128xf32>
    %35 = vector.broadcast %34 : vector<1x128xf32> to vector<8x128xf32>
    %36 = arith.addf %33, %35 : vector<8x128xf32>
    %cst_35 = arith.constant 0.000000e+00 : f32
    %37 = vector.broadcast %cst_35 : f32 to vector<8x128xf32>
    %38 = arith.maximumf %36, %37 : vector<8x128xf32>
    %c0_36 = arith.constant 0 : index
    %c0_37 = arith.constant 0 : index
    %39 = vector.load %arg14[%c0_36, %c0_37] : memref<128x128xf32, #tpu.memory_space<vmem>>, vector<128x128xf32>
    %cst_38 = arith.constant dense<0.000000e+00> : vector<8x128xf32>
    %40 = tpu.matmul %38, %39, %cst_38 {dimension_numbers = #tpu.dot_dimension_numbers<[1], [0], [0], [1], [0, 0, 1, 1], [], []>} : vector<8x128xf32>, vector<128x128xf32>, vector<8x128xf32> -> vector<8x128xf32>
    %c0_39 = arith.constant 0 : index
    %c0_40 = arith.constant 0 : index
    %41 = vector.load %arg15[%c0_39, %c0_40] : memref<1x128xf32, #tpu.memory_space<vmem>>, vector<1x128xf32>
    %42 = vector.broadcast %41 : vector<1x128xf32> to vector<8x128xf32>
    %43 = arith.addf %40, %42 : vector<8x128xf32>
    %cst_41 = arith.constant 0.000000e+00 : f32
    %44 = vector.broadcast %cst_41 : f32 to vector<8x128xf32>
    %45 = arith.maximumf %43, %44 : vector<8x128xf32>
    %46 = math.absf %43 : vector<8x128xf32>
    %cst_42 = arith.constant 0.000000e+00 : f32
    %47 = vector.broadcast %cst_42 : f32 to vector<8x128xf32>
    %48 = arith.subf %47, %46 : vector<8x128xf32>
    %49 = math.exp %48 : vector<8x128xf32>
    %cst_43 = arith.constant 1.000000e+00 : f32
    %50 = vector.broadcast %cst_43 : f32 to vector<8x128xf32>
    %51 = arith.addf %50, %49 : vector<8x128xf32>
    %52 = math.log %51 : vector<8x128xf32>
    %53 = arith.addf %45, %52 : vector<8x128xf32>
    %cst_44 = arith.constant 1.000000e-03 : f32
    %54 = vector.broadcast %cst_44 : f32 to vector<8x128xf32>
    %55 = arith.maximumf %53, %54 : vector<8x128xf32>
    %c0_45 = arith.constant 0 : index
    %c0_46 = arith.constant 0 : index
    %56 = vector.load %arg21[%c0_45, %c0_46] : memref<8x128xf32, #tpu.memory_space<vmem>>, vector<8x128xf32>
    tpu.vector_store %arg21[%c0_45, %c0_46], %55 {strides = array<i32>} : memref<8x128xf32, #tpu.memory_space<vmem>>, vector<8x128xf32>,
    %c0_47 = arith.constant 0 : index
    %c0_48 = arith.constant 0 : index
    %57 = vector.load %arg16[%c0_47, %c0_48] : memref<128x128xf32, #tpu.memory_space<vmem>>, vector<128x128xf32>
    %cst_49 = arith.constant dense<0.000000e+00> : vector<8x128xf32>
    %58 = tpu.matmul %18, %57, %cst_49 {dimension_numbers = #tpu.dot_dimension_numbers<[1], [0], [0], [1], [0, 0, 1, 1], [], []>} : vector<8x128xf32>, vector<128x128xf32>, vector<8x128xf32> -> vector<8x128xf32>
    %c0_50 = arith.constant 0 : index
    %c0_51 = arith.constant 0 : index
    %59 = vector.load %arg17[%c0_50, %c0_51] : memref<1x128xf32, #tpu.memory_space<vmem>>, vector<1x128xf32>
    %60 = vector.broadcast %59 : vector<1x128xf32> to vector<8x128xf32>
    %61 = arith.addf %58, %60 : vector<8x128xf32>
    %cst_52 = arith.constant 0.000000e+00 : f32
    %62 = vector.broadcast %cst_52 : f32 to vector<8x128xf32>
    %63 = arith.maximumf %61, %62 : vector<8x128xf32>
    %c0_53 = arith.constant 0 : index
    %c0_54 = arith.constant 0 : index
    %64 = vector.load %arg18[%c0_53, %c0_54] : memref<128x128xf32, #tpu.memory_space<vmem>>, vector<128x128xf32>
    %cst_55 = arith.constant dense<0.000000e+00> : vector<8x128xf32>
    %65 = tpu.matmul %63, %64, %cst_55 {dimension_numbers = #tpu.dot_dimension_numbers<[1], [0], [0], [1], [0, 0, 1, 1], [], []>} : vector<8x128xf32>, vector<128x128xf32>, vector<8x128xf32> -> vector<8x128xf32>
    %c0_56 = arith.constant 0 : index
    %c0_57 = arith.constant 0 : index
    %66 = vector.load %arg19[%c0_56, %c0_57] : memref<1x128xf32, #tpu.memory_space<vmem>>, vector<1x128xf32>
    %67 = vector.broadcast %66 : vector<1x128xf32> to vector<8x128xf32>
    %68 = arith.addf %65, %67 : vector<8x128xf32>
    %69 = tpu.iota {dimensions = array<i32: 1>} : vector<8x128xi32>
    %c42_i32 = arith.constant 42 : i32
    %70 = vector.broadcast %c42_i32 : i32 to vector<8x128xi32>
    %71 = arith.cmpi slt, %69, %70 : vector<8x128xi32>
    %cst_58 = arith.constant -1.000000e+30 : f32
    %72 = vector.broadcast %cst_58 : f32 to vector<8x128xf32>
    %73 = arith.select %71, %68, %72 : vector<8x128xi1>, vector<8x128xf32>
    %cst_59 = arith.constant dense<0xFF800000> : vector<8xf32>
    %74 = vector.multi_reduction <maximumf>, %73, %cst_59 [1] : vector<8x128xf32> to vector<8xf32>
    %75 = vector.shape_cast %74 : vector<8xf32> to vector<8x1xf32>
    %76 = vector.broadcast %75 : vector<8x1xf32> to vector<8x128xf32>
    %77 = arith.subf %73, %76 : vector<8x128xf32>
    %78 = math.exp %77 : vector<8x128xf32>
    %cst_60 = arith.constant dense<0.000000e+00> : vector<8xf32>
    %79 = vector.multi_reduction <add>, %78, %cst_60 [1] : vector<8x128xf32> to vector<8xf32>
    %80 = vector.shape_cast %79 : vector<8xf32> to vector<8x1xf32>
    %81 = vector.broadcast %80 : vector<8x1xf32> to vector<8x128xf32>
    %82 = arith.divf %78, %81 : vector<8x128xf32>
    %c0_61 = arith.constant 0 : index
    %c0_62 = arith.constant 0 : index
    %83 = vector.load %arg22[%c0_61, %c0_62] : memref<8x128xf32, #tpu.memory_space<vmem>>, vector<8x128xf32>
    tpu.vector_store %arg22[%c0_61, %c0_62], %82 {strides = array<i32>} : memref<8x128xf32, #tpu.memory_space<vmem>>, vector<8x128xf32>,
    return
  }
  func.func @transform_0(%arg0: i32) -> (i32, i32) {
    %c0_i32 = arith.constant 0 : i32
    %c0_i32_0 = arith.constant 0 : i32
    return %arg0, %c0_i32 : i32, i32
  }
  func.func @transform_1(%arg0: i32) -> (i32, i32) {
    %c0_i32 = arith.constant 0 : i32
    %c0_i32_0 = arith.constant 0 : i32
    return %arg0, %c0_i32 : i32, i32
  }
  func.func @transform_2(%arg0: i32) -> (i32, i32) {
    %c0_i32 = arith.constant 0 : i32
    %c0_i32_0 = arith.constant 0 : i32
    %c0_i32_1 = arith.constant 0 : i32
    return %c0_i32, %c0_i32_0 : i32, i32
  }
  func.func @transform_3(%arg0: i32) -> (i32, i32) {
    %c0_i32 = arith.constant 0 : i32
    %c0_i32_0 = arith.constant 0 : i32
    %c0_i32_1 = arith.constant 0 : i32
    return %c0_i32, %c0_i32_0 : i32, i32
  }
  func.func @transform_4(%arg0: i32) -> (i32, i32) {
    %c0_i32 = arith.constant 0 : i32
    %c0_i32_0 = arith.constant 0 : i32
    %c0_i32_1 = arith.constant 0 : i32
    return %c0_i32, %c0_i32_0 : i32, i32
  }
  func.func @transform_5(%arg0: i32) -> (i32, i32) {
    %c0_i32 = arith.constant 0 : i32
    %c0_i32_0 = arith.constant 0 : i32
    %c0_i32_1 = arith.constant 0 : i32
    return %c0_i32, %c0_i32_0 : i32, i32
  }
  func.func @transform_6(%arg0: i32) -> (i32, i32) {
    %c0_i32 = arith.constant 0 : i32
    %c0_i32_0 = arith.constant 0 : i32
    %c0_i32_1 = arith.constant 0 : i32
    return %c0_i32, %c0_i32_0 : i32, i32
  }
  func.func @transform_7(%arg0: i32) -> (i32, i32) {
    %c0_i32 = arith.constant 0 : i32
    %c0_i32_0 = arith.constant 0 : i32
    %c0_i32_1 = arith.constant 0 : i32
    return %c0_i32, %c0_i32_0 : i32, i32
  }
  func.func @transform_8(%arg0: i32) -> (i32, i32) {
    %c0_i32 = arith.constant 0 : i32
    %c0_i32_0 = arith.constant 0 : i32
    %c0_i32_1 = arith.constant 0 : i32
    return %c0_i32, %c0_i32_0 : i32, i32
  }
  func.func @transform_9(%arg0: i32) -> (i32, i32) {
    %c0_i32 = arith.constant 0 : i32
    %c0_i32_0 = arith.constant 0 : i32
    %c0_i32_1 = arith.constant 0 : i32
    return %c0_i32, %c0_i32_0 : i32, i32
  }
  func.func @transform_10(%arg0: i32) -> (i32, i32) {
    %c0_i32 = arith.constant 0 : i32
    %c0_i32_0 = arith.constant 0 : i32
    %c0_i32_1 = arith.constant 0 : i32
    return %c0_i32, %c0_i32_0 : i32, i32
  }
  func.func @transform_11(%arg0: i32) -> (i32, i32) {
    %c0_i32 = arith.constant 0 : i32
    %c0_i32_0 = arith.constant 0 : i32
    %c0_i32_1 = arith.constant 0 : i32
    return %c0_i32, %c0_i32_0 : i32, i32
  }
  func.func @transform_12(%arg0: i32) -> (i32, i32) {
    %c0_i32 = arith.constant 0 : i32
    %c0_i32_0 = arith.constant 0 : i32
    %c0_i32_1 = arith.constant 0 : i32
    return %c0_i32, %c0_i32_0 : i32, i32
  }
  func.func @transform_13(%arg0: i32) -> (i32, i32) {
    %c0_i32 = arith.constant 0 : i32
    %c0_i32_0 = arith.constant 0 : i32
    %c0_i32_1 = arith.constant 0 : i32
    return %c0_i32, %c0_i32_0 : i32, i32
  }
  func.func @transform_14(%arg0: i32) -> (i32, i32) {
    %c0_i32 = arith.constant 0 : i32
    %c0_i32_0 = arith.constant 0 : i32
    %c0_i32_1 = arith.constant 0 : i32
    return %c0_i32, %c0_i32_0 : i32, i32
  }
  func.func @transform_15(%arg0: i32) -> (i32, i32) {
    %c0_i32 = arith.constant 0 : i32
    %c0_i32_0 = arith.constant 0 : i32
    %c0_i32_1 = arith.constant 0 : i32
    return %c0_i32, %c0_i32_0 : i32, i32
  }
  func.func @transform_16(%arg0: i32) -> (i32, i32) {
    %c0_i32 = arith.constant 0 : i32
    %c0_i32_0 = arith.constant 0 : i32
    %c0_i32_1 = arith.constant 0 : i32
    return %c0_i32, %c0_i32_0 : i32, i32
  }
  func.func @transform_17(%arg0: i32) -> (i32, i32) {
    %c0_i32 = arith.constant 0 : i32
    %c0_i32_0 = arith.constant 0 : i32
    %c0_i32_1 = arith.constant 0 : i32
    return %c0_i32, %c0_i32_0 : i32, i32
  }
  func.func @transform_18(%arg0: i32) -> (i32, i32) {
    %c0_i32 = arith.constant 0 : i32
    %c0_i32_0 = arith.constant 0 : i32
    %c0_i32_1 = arith.constant 0 : i32
    return %c0_i32, %c0_i32_0 : i32, i32
  }
  func.func @transform_19(%arg0: i32) -> (i32, i32) {
    %c0_i32 = arith.constant 0 : i32
    %c0_i32_0 = arith.constant 0 : i32
    return %arg0, %c0_i32 : i32, i32
  }
  func.func @transform_20(%arg0: i32) -> (i32, i32) {
    %c0_i32 = arith.constant 0 : i32
    %c0_i32_0 = arith.constant 0 : i32
    return %arg0, %c0_i32 : i32, i32
  }
  func.func @transform_21(%arg0: i32) -> (i32, i32) {
    %c0_i32 = arith.constant 0 : i32
    %c0_i32_0 = arith.constant 0 : i32
    return %arg0, %c0_i32 : i32, i32
  }
}

</mosaic_0001>

<llo_original>
// kernel: tpu_custom_call.1
$region0: #{tpu_custom_call.1}
  #allocation0 [shape = 'u32[]', space=smem, size = 0x4, offset = 0x4, fixed_abs, tag = 'smem constant byte address 0x4 - core index']
  #allocation1 [shape = 'u32[72,128]{1,0:T(1,128)}', space=vmem, size = 0x9000, scoped, tag = 'internal scratch']
  %s0 = inlined_call_operand.vmem [shape: f32[8,10], index: 0, kind: input, shape index: {}]
  %s1 = inlined_call_operand.vmem [shape: f32[8,4], index: 1, kind: input, shape index: {}]
  %s2 = inlined_call_operand.hbm [shape: f32[10,128], index: 2, kind: input, shape index: {}]
  %s3 = inlined_call_operand.vmem [shape: f32[4,128], index: 3, kind: input, shape index: {}]
  %s4 = inlined_call_operand.vmem [shape: f32[1,128], index: 4, kind: input, shape index: {}]
  %s5 = inlined_call_operand.hbm [shape: f32[128,128], index: 5, kind: input, shape index: {}]
  %s6 = inlined_call_operand.vmem [shape: f32[1,128], index: 6, kind: input, shape index: {}]
  %s7 = inlined_call_operand.hbm [shape: f32[128,128], index: 7, kind: input, shape index: {}]
  %s8 = inlined_call_operand.vmem [shape: f32[1,128], index: 8, kind: input, shape index: {}]
  %s9 = inlined_call_operand.hbm [shape: f32[128,128], index: 9, kind: input, shape index: {}]
  %s10 = inlined_call_operand.vmem [shape: f32[1,128], index: 10, kind: input, shape index: {}]
  %s11 = inlined_call_operand.hbm [shape: f32[128,128], index: 11, kind: input, shape index: {}]
  %s12 = inlined_call_operand.vmem [shape: f32[1,128], index: 12, kind: input, shape index: {}]
  %s13 = inlined_call_operand.hbm [shape: f32[128,128], index: 13, kind: input, shape index: {}]
  %s14 = inlined_call_operand.vmem [shape: f32[1,128], index: 14, kind: input, shape index: {}]
  %s15 = inlined_call_operand.hbm [shape: f32[128,128], index: 15, kind: input, shape index: {}]
  %s16 = inlined_call_operand.vmem [shape: f32[1,128], index: 16, kind: input, shape index: {}]
  %s17 = inlined_call_operand.hbm [shape: f32[128,128], index: 17, kind: input, shape index: {}]
  %s18 = inlined_call_operand.vmem [shape: f32[1,128], index: 18, kind: input, shape index: {}]
  %s19 = inlined_call_operand.hbm [shape: f32[8,128], index: 19, kind: output, shape index: {0}]
  %s20 = inlined_call_operand.hbm [shape: f32[8,128], index: 20, kind: output, shape index: {1}]
  %s21 = inlined_call_operand.hbm [shape: f32[8,128], index: 21, kind: output, shape index: {2}]
  %22 = xla_tuple %s19, %s20, %s21
  %s23 = sld [smem:[#allocation0]]
  $region134: #{tpu_custom_call.1} parent=0
    _
  %s25 = ssub.s32 1, %s23
  %s26 = scalar_select 0, %s25, %s23
  $region1: #{tpu_custom_call.1} parent=0
    #allocation2 [shape = 'u8[8192]{0}', space=vmem, size = 0x2000, scoped, tag = 'input window, operand 2, single buffered']
    #allocation3 [shape = 's32[1]{0}', space=sflag, size = 0x4, scoped, tag = 'scoped memory for tpu_custom_call.1']
    #allocation4 [shape = 's32[1]{0}', space=sflag, size = 0x4, scoped, tag = 'scoped memory for tpu_custom_call.1']
    #allocation5 [shape = 'u8[65536]{0}', space=vmem, size = 0x10000, scoped, tag = 'input window, operand 5, single buffered']
    #allocation6 [shape = 's32[1]{0}', space=sflag, size = 0x4, scoped, tag = 'scoped memory for tpu_custom_call.1']
    #allocation7 [shape = 'u8[65536]{0}', space=vmem, size = 0x10000, scoped, tag = 'input window, operand 7, single buffered']
    #allocation8 [shape = 'u8[65536]{0}', space=vmem, size = 0x10000, scoped, tag = 'input window, operand 9, single buffered']
    #allocation9 [shape = 's32[1]{0}', space=sflag, size = 0x4, scoped, tag = 'scoped memory for tpu_custom_call.1']
    #allocation10 [shape = 'u8[65536]{0}', space=vmem, size = 0x10000, scoped, tag = 'input window, operand 11, single buffered']
    #allocation11 [shape = 'u8[65536]{0}', space=vmem, size = 0x10000, scoped, tag = 'input window, operand 13, single buffered']
    #allocation12 [shape = 's32[1]{0}', space=sflag, size = 0x4, scoped, tag = 'scoped memory for tpu_custom_call.1']
    #allocation13 [shape = 'u8[65536]{0}', space=vmem, size = 0x10000, scoped, tag = 'input window, operand 15, single buffered']
    #allocation14 [shape = 'u8[65536]{0}', space=vmem, size = 0x10000, scoped, tag = 'input window, operand 17, single buffered']
    #allocation15 [shape = 's32[1]{0}', space=sflag, size = 0x4, scoped, tag = 'scoped memory for tpu_custom_call.1']
    #allocation16 [shape = 'u8[4096]{0}', space=vmem, size = 0x1000, scoped, tag = 'output window, operand 0, single buffered']
    #allocation17 [shape = 'u8[4096]{0}', space=vmem, size = 0x1000, scoped, tag = 'output window, operand 1, single buffered']
    #allocation18 [shape = 's32[1]{0}', space=sflag, size = 0x4, scoped, tag = 'scoped memory for tpu_custom_call.1']
    #allocation19 [shape = 'u8[4096]{0}', space=vmem, size = 0x1000, scoped, tag = 'output window, operand 2, single buffered']
    %27 = vsyncpa [#allocation3], 0
    %28 = vsyncpa [#allocation6], 0
    %29 = vsyncpa [#allocation9], 0
    %30 = vsyncpa [#allocation12], 0
    %31 = vsyncpa [#allocation15], 0
    %32 = vsyncpa [#allocation4], 0
    %33 = vsyncpa [#allocation18], 0
    // Predicated region
    $region2: #{tpu_custom_call.1} parent=1 // pred_check
      _
    $region3: #{tpu_custom_call.1} parent=1 // pred_check_branch
      %35 = sbr.rel (0) target = $region5
    $region4: #{tpu_custom_call.1} parent=1 // pred_region
      _
    $region5: #{tpu_custom_call.1} parent=1 // pred_fallthru
      _
    // Predicated region
    $region6: #{tpu_custom_call.1} parent=1 // pred_check
      _
    $region7: #{tpu_custom_call.1} parent=1 // pred_check_branch
      %37 = sbr.rel (0) target = $region9
    $region8: #{tpu_custom_call.1} parent=1 // pred_region
      _
    $region9: #{tpu_custom_call.1} parent=1 // pred_fallthru
      _
    // Predicated region
    $region10: #{tpu_custom_call.1} parent=1 // pred_check
      _
    $region11: #{tpu_custom_call.1} parent=1 // pred_check_branch
      %39 = sbr.rel (0) target = $region13
    $region12: #{tpu_custom_call.1} parent=1 // pred_region
      %41 = vsyncadd [#allocation3], 0
      %s42 = sshll.u32 %s2, 4
      %s43 = int_to_ptr.hbm [resolvable:$true] %s42
      %s44 = sshll.u32 [#allocation2], 4
      %s45 = int_to_ptr.vmem [resolvable:$true] %s44
      %50 = dma.hbm_to_vmem [thread:$0]  %s43, 256, %s45, [#allocation3], 128, 128, 8
    $region13: #{tpu_custom_call.1} parent=1 // pred_fallthru
      _
    // Predicated region
    $region14: #{tpu_custom_call.1} parent=1 // pred_check
      _
    $region15: #{tpu_custom_call.1} parent=1 // pred_check_branch
      %52 = sbr.rel (0) target = $region17
    $region16: #{tpu_custom_call.1} parent=1 // pred_region
      _
    $region17: #{tpu_custom_call.1} parent=1 // pred_fallthru
      _
    // Predicated region
    $region18: #{tpu_custom_call.1} parent=1 // pred_check
      _
    $region19: #{tpu_custom_call.1} parent=1 // pred_check_branch
      %54 = sbr.rel (0) target = $region21
    $region20: #{tpu_custom_call.1} parent=1 // pred_region
      _
    $region21: #{tpu_custom_call.1} parent=1 // pred_fallthru
      _
    // Predicated region
    $region22: #{tpu_custom_call.1} parent=1 // pred_check
      _
    $region23: #{tpu_custom_call.1} parent=1 // pred_check_branch
      %56 = sbr.rel (0) target = $region25
    $region24: #{tpu_custom_call.1} parent=1 // pred_region
      %58 = vsyncadd [#allocation6], 0
      %s59 = sshll.u32 %s5, 4
      %s60 = int_to_ptr.hbm [resolvable:$true] %s59
      %s61 = sshll.u32 [#allocation5], 4
      %s62 = int_to_ptr.vmem [resolvable:$true] %s61
      %67 = dma.hbm_to_vmem [thread:$0]  %s60, 2048, %s62, [#allocation6], 128, 128, 8
    $region25: #{tpu_custom_call.1} parent=1 // pred_fallthru
      _
    // Predicated region
    $region26: #{tpu_custom_call.1} parent=1 // pred_check
      _
    $region27: #{tpu_custom_call.1} parent=1 // pred_check_branch
      %69 = sbr.rel (0) target = $region29
    $region28: #{tpu_custom_call.1} parent=1 // pred_region
      _
    $region29: #{tpu_custom_call.1} parent=1 // pred_fallthru
      _
    // Predicated region
    $region30: #{tpu_custom_call.1} parent=1 // pred_check
      _
    $region31: #{tpu_custom_call.1} parent=1 // pred_check_branch
      %71 = sbr.rel (0) target = $region33
    $region32: #{tpu_custom_call.1} parent=1 // pred_region
      %73 = vsyncadd [#allocation6], 0
      %s74 = sshll.u32 %s7, 4
      %s75 = int_to_ptr.hbm [resolvable:$true] %s74
      %s76 = sshll.u32 [#allocation7], 4
      %s77 = int_to_ptr.vmem [resolvable:$true] %s76
      %82 = dma.hbm_to_vmem [thread:$0]  %s75, 2048, %s77, [#allocation6], 128, 128, 8
    $region33: #{tpu_custom_call.1} parent=1 // pred_fallthru
      _
    // Predicated region
    $region34: #{tpu_custom_call.1} parent=1 // pred_check
      _
    $region35: #{tpu_custom_call.1} parent=1 // pred_check_branch
      %84 = sbr.rel (0) target = $region37
    $region36: #{tpu_custom_call.1} parent=1 // pred_region
      _
    $region37: #{tpu_custom_call.1} parent=1 // pred_fallthru
      _
    // Predicated region
    $region38: #{tpu_custom_call.1} parent=1 // pred_check
      _
    $region39: #{tpu_custom_call.1} parent=1 // pred_check_branch
      %86 = sbr.rel (0) target = $region41
    $region40: #{tpu_custom_call.1} parent=1 // pred_region
      %88 = vsyncadd [#allocation9], 0
      %s89 = sshll.u32 %s9, 4
      %s90 = int_to_ptr.hbm [resolvable:$true] %s89
      %s91 = sshll.u32 [#allocation8], 4
      %s92 = int_to_ptr.vmem [resolvable:$true] %s91
      %97 = dma.hbm_to_vmem [thread:$0]  %s90, 2048, %s92, [#allocation9], 128, 128, 8
    $region41: #{tpu_custom_call.1} parent=1 // pred_fallthru
      _
    // Predicated region
    $region42: #{tpu_custom_call.1} parent=1 // pred_check
      _
    $region43: #{tpu_custom_call.1} parent=1 // pred_check_branch
      %99 = sbr.rel (0) target = $region45
    $region44: #{tpu_custom_call.1} parent=1 // pred_region
      _
    $region45: #{tpu_custom_call.1} parent=1 // pred_fallthru
      _
    // Predicated region
    $region46: #{tpu_custom_call.1} parent=1 // pred_check
      _
    $region47: #{tpu_custom_call.1} parent=1 // pred_check_branch
      %101 = sbr.rel (0) target = $region49
    $region48: #{tpu_custom_call.1} parent=1 // pred_region
      %103 = vsyncadd [#allocation9], 0
      %s104 = sshll.u32 %s11, 4
      %s105 = int_to_ptr.hbm [resolvable:$true] %s104
      %s106 = sshll.u32 [#allocation10], 4
      %s107 = int_to_ptr.vmem [resolvable:$true] %s106
      %112 = dma.hbm_to_vmem [thread:$0]  %s105, 2048, %s107, [#allocation9], 128, 128, 8
    $region49: #{tpu_custom_call.1} parent=1 // pred_fallthru
      _
    // Predicated region
    $region50: #{tpu_custom_call.1} parent=1 // pred_check
      _
    $region51: #{tpu_custom_call.1} parent=1 // pred_check_branch
      %114 = sbr.rel (0) target = $region53
    $region52: #{tpu_custom_call.1} parent=1 // pred_region
      _
    $region53: #{tpu_custom_call.1} parent=1 // pred_fallthru
      _
    // Predicated region
    $region54: #{tpu_custom_call.1} parent=1 // pred_check
      _
    $region55: #{tpu_custom_call.1} parent=1 // pred_check_branch
      %116 = sbr.rel (0) target = $region57
    $region56: #{tpu_custom_call.1} parent=1 // pred_region
      %118 = vsyncadd [#allocation12], 0
      %s119 = sshll.u32 %s13, 4
      %s120 = int_to_ptr.hbm [resolvable:$true] %s119
      %s121 = sshll.u32 [#allocation11], 4
      %s122 = int_to_ptr.vmem [resolvable:$true] %s121
      %127 = dma.hbm_to_vmem [thread:$0]  %s120, 2048, %s122, [#allocation12], 128, 128, 8
    $region57: #{tpu_custom_call.1} parent=1 // pred_fallthru
      _
    // Predicated region
    $region58: #{tpu_custom_call.1} parent=1 // pred_check
      _
    $region59: #{tpu_custom_call.1} parent=1 // pred_check_branch
      %129 = sbr.rel (0) target = $region61
    $region60: #{tpu_custom_call.1} parent=1 // pred_region
      _
    $region61: #{tpu_custom_call.1} parent=1 // pred_fallthru
      _
    // Predicated region
    $region62: #{tpu_custom_call.1} parent=1 // pred_check
      _
    $region63: #{tpu_custom_call.1} parent=1 // pred_check_branch
      %131 = sbr.rel (0) target = $region65
    $region64: #{tpu_custom_call.1} parent=1 // pred_region
      %133 = vsyncadd [#allocation12], 0
      %s134 = sshll.u32 %s15, 4
      %s135 = int_to_ptr.hbm [resolvable:$true] %s134
      %s136 = sshll.u32 [#allocation13], 4
      %s137 = int_to_ptr.vmem [resolvable:$true] %s136
      %142 = dma.hbm_to_vmem [thread:$0]  %s135, 2048, %s137, [#allocation12], 128, 128, 8
    $region65: #{tpu_custom_call.1} parent=1 // pred_fallthru
      _
    // Predicated region
    $region66: #{tpu_custom_call.1} parent=1 // pred_check
      _
    $region67: #{tpu_custom_call.1} parent=1 // pred_check_branch
      %144 = sbr.rel (0) target = $region69
    $region68: #{tpu_custom_call.1} parent=1 // pred_region
      _
    $region69: #{tpu_custom_call.1} parent=1 // pred_fallthru
      _
    // Predicated region
    $region70: #{tpu_custom_call.1} parent=1 // pred_check
      _
    $region71: #{tpu_custom_call.1} parent=1 // pred_check_branch
      %146 = sbr.rel (0) target = $region73
    $region72: #{tpu_custom_call.1} parent=1 // pred_region
      %148 = vsyncadd [#allocation15], 0
      %s149 = sshll.u32 %s17, 4
      %s150 = int_to_ptr.hbm [resolvable:$true] %s149
      %s151 = sshll.u32 [#allocation14], 4
      %s152 = int_to_ptr.vmem [resolvable:$true] %s151
      %157 = dma.hbm_to_vmem [thread:$0]  %s150, 2048, %s152, [#allocation15], 128, 128, 8
    $region73: #{tpu_custom_call.1} parent=1 // pred_fallthru
      _
    // Predicated region
    $region74: #{tpu_custom_call.1} parent=1 // pred_check
      _
    $region75: #{tpu_custom_call.1} parent=1 // pred_check_branch
      %159 = sbr.rel (0) target = $region77
    $region76: #{tpu_custom_call.1} parent=1 // pred_region
      _
    $region77: #{tpu_custom_call.1} parent=1 // pred_fallthru
      _
    // Predicated region
    $region78: #{tpu_custom_call.1} parent=1 // pred_check
      _
    $region79: #{tpu_custom_call.1} parent=1 // pred_check_branch
      %161 = sbr.rel (0) target = $region81
    $region80: #{tpu_custom_call.1} parent=1 // pred_region
      %163 = dma.done [#allocation3], 256
    $region81: #{tpu_custom_call.1} parent=1 // pred_fallthru
      _
    // Predicated region
    $region82: #{tpu_custom_call.1} parent=1 // pred_check
      _
    $region83: #{tpu_custom_call.1} parent=1 // pred_check_branch
      %165 = sbr.rel (0) target = $region85
    $region84: #{tpu_custom_call.1} parent=1 // pred_region
      %167 = dma.done [#allocation6], 2048
    $region85: #{tpu_custom_call.1} parent=1 // pred_fallthru
      _
    // Predicated region
    $region86: #{tpu_custom_call.1} parent=1 // pred_check
      _
    $region87: #{tpu_custom_call.1} parent=1 // pred_check_branch
      %169 = sbr.rel (0) target = $region89
    $region88: #{tpu_custom_call.1} parent=1 // pred_region
      %171 = dma.done [#allocation6], 2048
    $region89: #{tpu_custom_call.1} parent=1 // pred_fallthru
      _
    // Predicated region
    $region90: #{tpu_custom_call.1} parent=1 // pred_check
      _
    $region91: #{tpu_custom_call.1} parent=1 // pred_check_branch
      %173 = sbr.rel (0) target = $region93
    $region92: #{tpu_custom_call.1} parent=1 // pred_region
      %175 = dma.done [#allocation9], 2048
    $region93: #{tpu_custom_call.1} parent=1 // pred_fallthru
      _
    // Predicated region
    $region94: #{tpu_custom_call.1} parent=1 // pred_check
      _
    $region95: #{tpu_custom_call.1} parent=1 // pred_check_branch
      %177 = sbr.rel (0) target = $region97
    $region96: #{tpu_custom_call.1} parent=1 // pred_region
      %179 = dma.done [#allocation9], 2048
    $region97: #{tpu_custom_call.1} parent=1 // pred_fallthru
      _
    // Predicated region
    $region98: #{tpu_custom_call.1} parent=1 // pred_check
      _
    $region99: #{tpu_custom_call.1} parent=1 // pred_check_branch
      %181 = sbr.rel (0) target = $region101
    $region100: #{tpu_custom_call.1} parent=1 // pred_region
      %183 = dma.done [#allocation12], 2048
    $region101: #{tpu_custom_call.1} parent=1 // pred_fallthru
      _
    // Predicated region
    $region102: #{tpu_custom_call.1} parent=1 // pred_check
      _
    $region103: #{tpu_custom_call.1} parent=1 // pred_check_branch
      %185 = sbr.rel (0) target = $region105
    $region104: #{tpu_custom_call.1} parent=1 // pred_region
      %187 = dma.done [#allocation12], 2048
    $region105: #{tpu_custom_call.1} parent=1 // pred_fallthru
      _
    // Predicated region
    $region106: #{tpu_custom_call.1} parent=1 // pred_check
      _
    $region107: #{tpu_custom_call.1} parent=1 // pred_check_branch
      %189 = sbr.rel (0) target = $region109
    $region108: #{tpu_custom_call.1} parent=1 // pred_region
      %191 = dma.done [#allocation15], 2048
    $region109: #{tpu_custom_call.1} parent=1 // pred_fallthru
      _
    %v192 = vld [vmem:[%s0] sm:$0xff]
    %v193 = vld [vmem:[#allocation2] sm:$0xff]
    %v194 = vld [vmem:[#allocation2 + $0x8] sm:$0x3]
    %v195 = vld [vmem:[%s1] sm:$0xff]
    %v196 = vld [vmem:[%s3] sm:$0xf]
    %vm197 = vcmask 31744
    %v199 = vsel %vm197, %v195, 0
    %vm201 = vcmask 1043456
    %v203 = vsel %vm201, %v196, 0
    %205 = vmatpush.msra.mxu0 0.0
    %206 = vmatpush.msra.mxu0 0.0
    %207 = vmatpush.msra.mxu0 0.0
    %208 = vmatpush.msra.mxu0 0.0
    %209 = vmatpush.msra.mxu0 0.0
    %210 = vmatpush.msra.mxu0 0.0
    %211 = vmatpush.msra.mxu0 0.0
    %212 = vmatpush.msra.mxu0 0.0
    %213 = vmatpush.msra.mxu0 0.0
    %214 = vmatpush.msra.mxu0 0.0
    %215 = vmatpush.msra.mxu0 0.0
    %216 = vmatpush.msra.mxu0 0.0
    %217 = vmatpush.msra.mxu0 0.0
    %218 = vmatpush.msra.mxu0 0.0
    %219 = vmatpush.msra.mxu0 0.0
    %220 = vmatpush.msra.mxu0 %v203
    %221 = vmatmul.f32.gmra.mxu0 %v199
    %v222 = vpop.f32.mrf.mxu0
    %v223 = vadd.f32 0.0, %v222
    %224 = vdwg.mxu0
    %vm225 = vcmask 80896
    %v227 = vsel %vm225, %v192, 0
    %vm229 = vcmask 1041408
    %v231 = vsel %vm229, %v194, 0
    %233 = vmatpush.msra.mxu0 0.0
    %234 = vmatpush.msra.mxu0 0.0
    %235 = vmatpush.msra.mxu0 0.0
    %236 = vmatpush.msra.mxu0 0.0
    %237 = vmatpush.msra.mxu0 0.0
    %238 = vmatpush.msra.mxu0 0.0
    %239 = vmatpush.msra.mxu0 0.0
    %240 = vmatpush.msra.mxu0 0.0
    %241 = vmatpush.msra.mxu0 0.0
    %242 = vmatpush.msra.mxu0 0.0
    %243 = vmatpush.msra.mxu0 0.0
    %244 = vmatpush.msra.mxu0 0.0
    %245 = vmatpush.msra.mxu0 0.0
    %246 = vmatpush.msra.mxu0 0.0
    %247 = vmatpush.msra.mxu0 %v231
    %248 = vmatpush.msra.mxu0 %v193
    %249 = vmatmul.f32.gmra.mxu0 %v227
    %v250 = vpop.f32.mrf.mxu0
    %v251 = vadd.f32 %v223, %v250
    %252 = vdwg.mxu0
    %v253 = vld [vmem:[%s4] sm:$0x1]
    %v255 = vperm.slane %v253, 0
    %v257 = vadd.f32 %v251, %v255
    %v258 = vmax.f32 %v257, 0.0
    %v259 = vld [vmem:[#allocation5] sm:$0xff]
    %v260 = vld [vmem:[#allocation5 + $0x8] sm:$0xff]
    %v261 = vld [vmem:[#allocation5 + $0x10] sm:$0xff]
    %v262 = vld [vmem:[#allocation5 + $0x18] sm:$0xff]
    %v263 = vld [vmem:[#allocation5 + $0x20] sm:$0xff]
    %v264 = vld [vmem:[#allocation5 + $0x28] sm:$0xff]
    %v265 = vld [vmem:[#allocation5 + $0x30] sm:$0xff]
    %v266 = vld [vmem:[#allocation5 + $0x38] sm:$0xff]
    %v267 = vld [vmem:[#allocation5 + $0x40] sm:$0xff]
    %v268 = vld [vmem:[#allocation5 + $0x48] sm:$0xff]
    %v269 = vld [vmem:[#allocation5 + $0x50] sm:$0xff]
    %v270 = vld [vmem:[#allocation5 + $0x58] sm:$0xff]
    %v271 = vld [vmem:[#allocation5 + $0x60] sm:$0xff]
    %v272 = vld [vmem:[#allocation5 + $0x68] sm:$0xff]
    %v273 = vld [vmem:[#allocation5 + $0x70] sm:$0xff]
    %v274 = vld [vmem:[#allocation5 + $0x78] sm:$0xff]
    %v275 = vld [vmem:[%s6] sm:$0x1]
    %v277 = vperm.slane %v275, 0
    %279 = vmatpush.msra.mxu0 %v274
    %280 = vmatpush.msra.mxu0 %v273
    %281 = vmatpush.msra.mxu0 %v272
    %282 = vmatpush.msra.mxu0 %v271
    %283 = vmatpush.msra.mxu0 %v270
    %284 = vmatpush.msra.mxu0 %v269
    %285 = vmatpush.msra.mxu0 %v268
    %286 = vmatpush.msra.mxu0 %v267
    %287 = vmatpush.msra.mxu0 %v266
    %288 = vmatpush.msra.mxu0 %v265
    %289 = vmatpush.msra.mxu0 %v264
    %290 = vmatpush.msra.mxu0 %v263
    %291 = vmatpush.msra.mxu0 %v262
    %292 = vmatpush.msra.mxu0 %v261
    %293 = vmatpush.msra.mxu0 %v260
    %294 = vmatpush.msra.mxu0 %v259
    %295 = vmatmul.f32.gmra.mxu0 %v258
    %v296 = vpop.f32.mrf.mxu0
    %v297 = vadd.f32 %v277, %v296
    %298 = vdwg.mxu0
    %v299 = vmax.f32 %v297, 0.0
    %v300 = vld [vmem:[#allocation7] sm:$0xff]
    %v301 = vld [vmem:[#allocation7 + $0x8] sm:$0xff]
    %v302 = vld [vmem:[#allocation7 + $0x10] sm:$0xff]
    %v303 = vld [vmem:[#allocation7 + $0x18] sm:$0xff]
    %v304 = vld [vmem:[#allocation7 + $0x20] sm:$0xff]
    %v305 = vld [vmem:[#allocation7 + $0x28] sm:$0xff]
    %v306 = vld [vmem:[#allocation7 + $0x30] sm:$0xff]
    %v307 = vld [vmem:[#allocation7 + $0x38] sm:$0xff]
    %v308 = vld [vmem:[#allocation7 + $0x40] sm:$0xff]
    %v309 = vld [vmem:[#allocation7 + $0x48] sm:$0xff]
    %v310 = vld [vmem:[#allocation7 + $0x50] sm:$0xff]
    %v311 = vld [vmem:[#allocation7 + $0x58] sm:$0xff]
    %v312 = vld [vmem:[#allocation7 + $0x60] sm:$0xff]
    %v313 = vld [vmem:[#allocation7 + $0x68] sm:$0xff]
    %v314 = vld [vmem:[#allocation7 + $0x70] sm:$0xff]
    %v315 = vld [vmem:[#allocation7 + $0x78] sm:$0xff]
    %v316 = vld [vmem:[%s8] sm:$0x1]
    %v318 = vperm.slane %v316, 0
    %320 = vmatpush.msra.mxu0 %v315
    %321 = vmatpush.msra.mxu0 %v314
    %322 = vmatpush.msra.mxu0 %v313
    %323 = vmatpush.msra.mxu0 %v312
    %324 = vmatpush.msra.mxu0 %v311
    %325 = vmatpush.msra.mxu0 %v310
    %326 = vmatpush.msra.mxu0 %v309
    %327 = vmatpush.msra.mxu0 %v308
    %328 = vmatpush.msra.mxu0 %v307
    %329 = vmatpush.msra.mxu0 %v306
    %330 = vmatpush.msra.mxu0 %v305
    %331 = vmatpush.msra.mxu0 %v304
    %332 = vmatpush.msra.mxu0 %v303
    %333 = vmatpush.msra.mxu0 %v302
    %334 = vmatpush.msra.mxu0 %v301
    %335 = vmatpush.msra.mxu0 %v300
    %336 = vmatmul.f32.gmra.mxu0 %v299
    %v337 = vpop.f32.mrf.mxu0
    %v338 = vadd.f32 %v318, %v337
    %339 = vdwg.mxu0
    %v340 = vmax.f32 %v338, 0.0
    %v341 = vld [vmem:[#allocation8] sm:$0xff]
    %v342 = vld [vmem:[#allocation8 + $0x8] sm:$0xff]
    %v343 = vld [vmem:[#allocation8 + $0x10] sm:$0xff]
    %v344 = vld [vmem:[#allocation8 + $0x18] sm:$0xff]
    %v345 = vld [vmem:[#allocation8 + $0x20] sm:$0xff]
    %v346 = vld [vmem:[#allocation8 + $0x28] sm:$0xff]
    %v347 = vld [vmem:[#allocation8 + $0x30] sm:$0xff]
    %v348 = vld [vmem:[#allocation8 + $0x38] sm:$0xff]
    %v349 = vld [vmem:[#allocation8 + $0x40] sm:$0xff]
    %v350 = vld [vmem:[#allocation8 + $0x48] sm:$0xff]
    %v351 = vld [vmem:[#allocation8 + $0x50] sm:$0xff]
    %v352 = vld [vmem:[#allocation8 + $0x58] sm:$0xff]
    %v353 = vld [vmem:[#allocation8 + $0x60] sm:$0xff]
    %v354 = vld [vmem:[#allocation8 + $0x68] sm:$0xff]
    %v355 = vld [vmem:[#allocation8 + $0x70] sm:$0xff]
    %v356 = vld [vmem:[#allocation8 + $0x78] sm:$0xff]
    %v357 = vld [vmem:[%s10] sm:$0x1]
    %v359 = vperm.slane %v357, 0
    %361 = vmatpush.msra.mxu0 %v356
    %362 = vmatpush.msra.mxu0 %v355
    %363 = vmatpush.msra.mxu0 %v354
    %364 = vmatpush.msra.mxu0 %v353
    %365 = vmatpush.msra.mxu0 %v352
    %366 = vmatpush.msra.mxu0 %v351
    %367 = vmatpush.msra.mxu0 %v350
    %368 = vmatpush.msra.mxu0 %v349
    %369 = vmatpush.msra.mxu0 %v348
    %370 = vmatpush.msra.mxu0 %v347
    %371 = vmatpush.msra.mxu0 %v346
    %372 = vmatpush.msra.mxu0 %v345
    %373 = vmatpush.msra.mxu0 %v344
    %374 = vmatpush.msra.mxu0 %v343
    %375 = vmatpush.msra.mxu0 %v342
    %376 = vmatpush.msra.mxu0 %v341
    %377 = vmatmul.f32.gmra.mxu0 %v340
    %v378 = vpop.f32.mrf.mxu0
    %v379 = vadd.f32 %v359, %v378
    %380 = vdwg.mxu0
    %381 = vst [vmem:[#allocation16] sm:$0xff] %v379
    %v382 = vld [vmem:[#allocation10] sm:$0xff]
    %v383 = vld [vmem:[#allocation10 + $0x8] sm:$0xff]
    %v384 = vld [vmem:[#allocation10 + $0x10] sm:$0xff]
    %v385 = vld [vmem:[#allocation10 + $0x18] sm:$0xff]
    %v386 = vld [vmem:[#allocation10 + $0x20] sm:$0xff]
    %v387 = vld [vmem:[#allocation10 + $0x28] sm:$0xff]
    %v388 = vld [vmem:[#allocation10 + $0x30] sm:$0xff]
    %v389 = vld [vmem:[#allocation10 + $0x38] sm:$0xff]
    %v390 = vld [vmem:[#allocation10 + $0x40] sm:$0xff]
    %v391 = vld [vmem:[#allocation10 + $0x48] sm:$0xff]
    %v392 = vld [vmem:[#allocation10 + $0x50] sm:$0xff]
    %v393 = vld [vmem:[#allocation10 + $0x58] sm:$0xff]
    %v394 = vld [vmem:[#allocation10 + $0x60] sm:$0xff]
    %v395 = vld [vmem:[#allocation10 + $0x68] sm:$0xff]
    %v396 = vld [vmem:[#allocation10 + $0x70] sm:$0xff]
    %v397 = vld [vmem:[#allocation10 + $0x78] sm:$0xff]
    %v398 = vld [vmem:[%s12] sm:$0x1]
    %v400 = vperm.slane %v398, 0
    %402 = vmatpush.msra.mxu0 %v397
    %403 = vmatpush.msra.mxu0 %v396
    %404 = vmatpush.msra.mxu0 %v395
    %405 = vmatpush.msra.mxu0 %v394
    %406 = vmatpush.msra.mxu0 %v393
    %407 = vmatpush.msra.mxu0 %v392
    %408 = vmatpush.msra.mxu0 %v391
    %409 = vmatpush.msra.mxu0 %v390
    %410 = vmatpush.msra.mxu0 %v389
    %411 = vmatpush.msra.mxu0 %v388
    %412 = vmatpush.msra.mxu0 %v387
    %413 = vmatpush.msra.mxu0 %v386
    %414 = vmatpush.msra.mxu0 %v385
    %415 = vmatpush.msra.mxu0 %v384
    %416 = vmatpush.msra.mxu0 %v383
    %417 = vmatpush.msra.mxu0 %v382
    %418 = vmatmul.f32.gmra.mxu0 %v299
    %v419 = vpop.f32.mrf.mxu0
    %v420 = vadd.f32 %v400, %v419
    %421 = vdwg.mxu0
    %v422 = vmax.f32 %v420, 0.0
    %v423 = vld [vmem:[#allocation11] sm:$0xff]
    %v424 = vld [vmem:[#allocation11 + $0x8] sm:$0xff]
    %v425 = vld [vmem:[#allocation11 + $0x10] sm:$0xff]
    %v426 = vld [vmem:[#allocation11 + $0x18] sm:$0xff]
    %v427 = vld [vmem:[#allocation11 + $0x20] sm:$0xff]
    %v428 = vld [vmem:[#allocation11 + $0x28] sm:$0xff]
    %v429 = vld [vmem:[#allocation11 + $0x30] sm:$0xff]
    %v430 = vld [vmem:[#allocation11 + $0x38] sm:$0xff]
    %v431 = vld [vmem:[#allocation11 + $0x40] sm:$0xff]
    %v432 = vld [vmem:[#allocation11 + $0x48] sm:$0xff]
    %v433 = vld [vmem:[#allocation11 + $0x50] sm:$0xff]
    %v434 = vld [vmem:[#allocation11 + $0x58] sm:$0xff]
    %v435 = vld [vmem:[#allocation11 + $0x60] sm:$0xff]
    %v436 = vld [vmem:[#allocation11 + $0x68] sm:$0xff]
    %v437 = vld [vmem:[#allocation11 + $0x70] sm:$0xff]
    %v438 = vld [vmem:[#allocation11 + $0x78] sm:$0xff]
    %v439 = vld [vmem:[%s14] sm:$0x1]
    %v441 = vperm.slane %v439, 0
    %443 = vmatpush.msra.mxu0 %v438
    %444 = vmatpush.msra.mxu0 %v437
    %445 = vmatpush.msra.mxu0 %v436
    %446 = vmatpush.msra.mxu0 %v435
    %447 = vmatpush.msra.mxu0 %v434
    %448 = vmatpush.msra.mxu0 %v433
    %449 = vmatpush.msra.mxu0 %v432
    %450 = vmatpush.msra.mxu0 %v431
    %451 = vmatpush.msra.mxu0 %v430
    %452 = vmatpush.msra.mxu0 %v429
    %453 = vmatpush.msra.mxu0 %v428
    %454 = vmatpush.msra.mxu0 %v427
    %455 = vmatpush.msra.mxu0 %v426
    %456 = vmatpush.msra.mxu0 %v425
    %457 = vmatpush.msra.mxu0 %v424
    %458 = vmatpush.msra.mxu0 %v423
    %459 = vmatmul.f32.gmra.mxu0 %v422
    %v460 = vpop.f32.mrf.mxu0
    %v461 = vadd.f32 %v441, %v460
    %462 = vdwg.mxu0
    %v463 = vmax.f32 %v461, 0.0
    %v464 = vand.u32 2147483647, %v461
    %v465 = vsub.f32 0.0, %v464
    %v466 = vmul.f32 %v465, 1.442695
    %v467 = vpow.pop %v466
    %v468 = vadd.f32 %v467, 1.0
    %v469 = vlog2.pop %v468
    %v470 = vmul.f32 %v469, 0.6931472
    %v471 = vadd.f32 %v463, %v470
    %v472 = vmax.f32 %v471, 0.001
    %473 = vst [vmem:[#allocation17] sm:$0xff] %v472
    %v474 = vld [vmem:[#allocation13] sm:$0xff]
    %v475 = vld [vmem:[#allocation13 + $0x8] sm:$0xff]
    %v476 = vld [vmem:[#allocation13 + $0x10] sm:$0xff]
    %v477 = vld [vmem:[#allocation13 + $0x18] sm:$0xff]
    %v478 = vld [vmem:[#allocation13 + $0x20] sm:$0xff]
    %v479 = vld [vmem:[#allocation13 + $0x28] sm:$0xff]
    %v480 = vld [vmem:[#allocation13 + $0x30] sm:$0xff]
    %v481 = vld [vmem:[#allocation13 + $0x38] sm:$0xff]
    %v482 = vld [vmem:[#allocation13 + $0x40] sm:$0xff]
    %v483 = vld [vmem:[#allocation13 + $0x48] sm:$0xff]
    %v484 = vld [vmem:[#allocation13 + $0x50] sm:$0xff]
    %v485 = vld [vmem:[#allocation13 + $0x58] sm:$0xff]
    %v486 = vld [vmem:[#allocation13 + $0x60] sm:$0xff]
    %v487 = vld [vmem:[#allocation13 + $0x68] sm:$0xff]
    %v488 = vld [vmem:[#allocation13 + $0x70] sm:$0xff]
    %v489 = vld [vmem:[#allocation13 + $0x78] sm:$0xff]
    %v490 = vld [vmem:[%s16] sm:$0x1]
    %v492 = vperm.slane %v490, 0
    %494 = vmatpush.msra.mxu0 %v489
    %495 = vmatpush.msra.mxu0 %v488
    %496 = vmatpush.msra.mxu0 %v487
    %497 = vmatpush.msra.mxu0 %v486
    %498 = vmatpush.msra.mxu0 %v485
    %499 = vmatpush.msra.mxu0 %v484
    %500 = vmatpush.msra.mxu0 %v483
    %501 = vmatpush.msra.mxu0 %v482
    %502 = vmatpush.msra.mxu0 %v481
    %503 = vmatpush.msra.mxu0 %v480
    %504 = vmatpush.msra.mxu0 %v479
    %505 = vmatpush.msra.mxu0 %v478
    %506 = vmatpush.msra.mxu0 %v477
    %507 = vmatpush.msra.mxu0 %v476
    %508 = vmatpush.msra.mxu0 %v475
    %509 = vmatpush.msra.mxu0 %v474
    %510 = vmatmul.f32.gmra.mxu0 %v299
    %v511 = vpop.f32.mrf.mxu0
    %v512 = vadd.f32 %v492, %v511
    %513 = vdwg.mxu0
    %v514 = vmax.f32 %v512, 0.0
    %v515 = vld [vmem:[#allocation14] sm:$0xff]
    %v516 = vld [vmem:[#allocation14 + $0x8] sm:$0xff]
    %v517 = vld [vmem:[#allocation14 + $0x10] sm:$0xff]
    %v518 = vld [vmem:[#allocation14 + $0x18] sm:$0xff]
    %v519 = vld [vmem:[#allocation14 + $0x20] sm:$0xff]
    %v520 = vld [vmem:[#allocation14 + $0x28] sm:$0xff]
    %v521 = vld [vmem:[#allocation14 + $0x30] sm:$0xff]
    %v522 = vld [vmem:[#allocation14 + $0x38] sm:$0xff]
    %v523 = vld [vmem:[#allocation14 + $0x40] sm:$0xff]
    %v524 = vld [vmem:[#allocation14 + $0x48] sm:$0xff]
    %v525 = vld [vmem:[#allocation14 + $0x50] sm:$0xff]
    %v526 = vld [vmem:[#allocation14 + $0x58] sm:$0xff]
    %v527 = vld [vmem:[#allocation14 + $0x60] sm:$0xff]
    %v528 = vld [vmem:[#allocation14 + $0x68] sm:$0xff]
    %v529 = vld [vmem:[#allocation14 + $0x70] sm:$0xff]
    %v530 = vld [vmem:[#allocation14 + $0x78] sm:$0xff]
    %v531 = vld [vmem:[%s18] sm:$0x1]
    %v533 = vperm.slane %v531, 0
    %535 = vmatpush.msra.mxu0 %v530
    %536 = vmatpush.msra.mxu0 %v529
    %537 = vmatpush.msra.mxu0 %v528
    %538 = vmatpush.msra.mxu0 %v527
    %539 = vmatpush.msra.mxu0 %v526
    %540 = vmatpush.msra.mxu0 %v525
    %541 = vmatpush.msra.mxu0 %v524
    %542 = vmatpush.msra.mxu0 %v523
    %543 = vmatpush.msra.mxu0 %v522
    %544 = vmatpush.msra.mxu0 %v521
    %545 = vmatpush.msra.mxu0 %v520
    %546 = vmatpush.msra.mxu0 %v519
    %547 = vmatpush.msra.mxu0 %v518
    %548 = vmatpush.msra.mxu0 %v517
    %549 = vmatpush.msra.mxu0 %v516
    %550 = vmatpush.msra.mxu0 %v515
    %551 = vmatmul.f32.gmra.mxu0 %v514
    %v552 = vpop.f32.mrf.mxu0
    %v553 = vadd.f32 %v533, %v552
    %554 = vdwg.mxu0
    %v555 = vlaneseq
    %v556 = vand.u32 %v555, 127
    %vm557 = vcmp.lt.s32.totalorder %v556, 42
    %v558 = vsel %vm557, %v553, -1e+30
    %559 = vmax.xlane.f32.xlu0 %v558
    %v560 = vpop.xlane.xlu0 %559
    %v561 = vsub.f32 %v558, %v560
    %v562 = vmul.f32 %v561, 1.442695
    %v563 = vpow.pop %v562
    %564 = vadd.xlane.f32.xlu0 %v563
    %v565 = vpop.xlane.xlu0 %564
    %v566 = vrcp.pop %v565
    %v567 = vmul.f32 %v565, %v566
    %v568 = vsub.f32 1.0, %v567
    %v569 = vmul.f32 %v566, %v568
    %v570 = vadd.f32 %v566, %v569
    %vm571 = vweird.f32 %v565
    %vm572 = vweird.f32 %v566
    %vm573 = vmor %vm571, %vm572
    %v574 = vsel %vm573, %v566, %v570
    %v575 = vand.u32 2147483647, %v565
    %vm576 = vcmp.eq.f32.partialorder %v575, 8.507059e+37
    %v577 = vand.u32 %v565, 2147483648
    %v578 = vor.u32 1.1754944e-38, %v577
    %v579 = vsel %vm576, %v578, %v574
    %v580 = vmul.f32 %v563, %v579
    %581 = vst [vmem:[#allocation19] sm:$0xff] %v580
    // Predicated region
    $region110: #{tpu_custom_call.1} parent=1 // pred_check
      _
    $region111: #{tpu_custom_call.1} parent=1 // pred_check_branch
      %583 = sbr.rel (0) target = $region113
    $region112: #{tpu_custom_call.1} parent=1 // pred_region
      %585 = vsyncadd [#allocation4], 0
      %s587 = sshll.u32 [#allocation16], 4
      %s588 = int_to_ptr.vmem [resolvable:$true] %s587
      %s589 = sshll.u32 %s19, 4
      %s590 = int_to_ptr.hbm [resolvable:$true] %s589
      %592 = dma.vmem_to_hbm [thread:$0]  %s588, 128, %s590, [#allocation4]
    $region113: #{tpu_custom_call.1} parent=1 // pred_fallthru
      _
    // Predicated region
    $region114: #{tpu_custom_call.1} parent=1 // pred_check
      _
    $region115: #{tpu_custom_call.1} parent=1 // pred_check_branch
      %594 = sbr.rel (0) target = $region117
    $region116: #{tpu_custom_call.1} parent=1 // pred_region
      %596 = vsyncadd [#allocation18], 0
      %s598 = sshll.u32 [#allocation17], 4
      %s599 = int_to_ptr.vmem [resolvable:$true] %s598
      %s600 = sshll.u32 %s20, 4
      %s601 = int_to_ptr.hbm [resolvable:$true] %s600
      %603 = dma.vmem_to_hbm [thread:$0]  %s599, 128, %s601, [#allocation18]
    $region117: #{tpu_custom_call.1} parent=1 // pred_fallthru
      _
    // Predicated region
    $region118: #{tpu_custom_call.1} parent=1 // pred_check
      _
    $region119: #{tpu_custom_call.1} parent=1 // pred_check_branch
      %605 = sbr.rel (0) target = $region121
    $region120: #{tpu_custom_call.1} parent=1 // pred_region
      %607 = vsyncadd [#allocation18], 0
      %s609 = sshll.u32 [#allocation19], 4
      %s610 = int_to_ptr.vmem [resolvable:$true] %s609
      %s611 = sshll.u32 %s21, 4
      %s612 = int_to_ptr.hbm [resolvable:$true] %s611
      %614 = dma.vmem_to_hbm [thread:$0]  %s610, 128, %s612, [#allocation18]
    $region121: #{tpu_custom_call.1} parent=1 // pred_fallthru
      _
    // Predicated region
    $region122: #{tpu_custom_call.1} parent=1 // pred_check
      _
    $region123: #{tpu_custom_call.1} parent=1 // pred_check_branch
      %616 = sbr.rel (0) target = $region125
    $region124: #{tpu_custom_call.1} parent=1 // pred_region
      %618 = dma.done [#allocation4], 128
    $region125: #{tpu_custom_call.1} parent=1 // pred_fallthru
      _
    // Predicated region
    $region126: #{tpu_custom_call.1} parent=1 // pred_check
      _
    $region127: #{tpu_custom_call.1} parent=1 // pred_check_branch
      %620 = sbr.rel (0) target = $region129
    $region128: #{tpu_custom_call.1} parent=1 // pred_region
      %622 = dma.done [#allocation18], 128
    $region129: #{tpu_custom_call.1} parent=1 // pred_fallthru
      _
    // Predicated region
    $region130: #{tpu_custom_call.1} parent=1 // pred_check
      _
    $region131: #{tpu_custom_call.1} parent=1 // pred_check_branch
      %624 = sbr.rel (0) target = $region133
    $region132: #{tpu_custom_call.1} parent=1 // pred_region
      %626 = dma.done [#allocation18], 128
    $region133: #{tpu_custom_call.1} parent=1 // pred_fallthru
      _
    %627 = vsyncpa [#allocation3], 1
    %628 = vsyncpa [#allocation6], 1
    %629 = vsyncpa [#allocation9], 1
    %630 = vsyncpa [#allocation12], 1
    %631 = vsyncpa [#allocation15], 1
    %632 = vsyncpa [#allocation4], 1
    %633 = vsyncpa [#allocation18], 1

</llo_original>
